<compile_context>
chip_gen: v7x
topology: tpu7x:2x2x1
jax: 0.10.0
libtpu: 0.0.40
codegen_flags: <defaults>
</compile_context>

<pallas_src>
import math

import jax
import jax.numpy as jnp
from jax.experimental import pallas as pl
from jax.experimental.pallas import tpu as pltpu

# ----------------------------- problem sizes ------------------------------- #
B = 2            # batch
S = 8            # sequence length
IN_DIMS = (8, 8) # input_dims  -> sum(input_dims) = encoder input feature dim
E = sum(IN_DIMS) # encoder input dim (emb feature dim)
H_ENC = 128      # encoder hidden dim (module uses 128)
LATENT = 64      # latent_dim (small for this synthetic run)
H_DEC = 128      # decoder hidden dim
H_CNF = 128      # cnf_hidden_dims[0] (small for this synthetic run)
CNF_T = 1.0      # cnf_T
CONDITION_DIM = 0  # cnf_condition_dim (default) -> condition_loss == 0

IN0, IN1 = IN_DIMS
DCOLS = E + IN0 + IN1 + 1  # packed activation-slab width (emb|tx|ty|mask)


# ------------------------------- the kernel -------------------------------- #
def cvaef_kernel(
    data_ref,   # [B*S, DCOLS]  packed (emb | token_x | token_y | mask) slab
    eps_ref,    # [B, LATENT]   reparameterization noise
    win_ref,    # [E+IN0, H_ENC+H_DEC]  block-diag(enc_w, dec_txw)
    wmulv_ref,  # [H_ENC, 2*LATENT]     concat(mu_w, lv_w)
    wzc1_ref,   # [LATENT, H_DEC+H_CNF] concat(dec_zw, cnf_w1)
    wout_ref,   # [H_DEC, IN1]          decoder out-proj
    wc2_ref,    # [H_CNF, LATENT]       ODEnet layer 2
    bias_ref,   # [8, 128] rows: be | (bmu|blv) | bz | b1 | bout | b2 | ctr | 0
    out_ref,    # SMEM [4]: (recon, entropy, prior, condition) losses
):
    f32 = jnp.float32

    data = data_ref[...]                       # [B*S, DCOLS]
    emb_tx = data[:, : E + IN0]                # [B*S, E+IN0]   (lane offset 0)
    ty = data[:, E + IN0 : E + IN0 + IN1]      # [B*S, IN1]
    mcol = data[:, E + IN0 + IN1 :]            # [B*S, 1]       (1.0 = valid)
    bias = bias_ref[...]                       # [8, 128]

    # ---- fused encoder in-proj + decoder token_x proj (block-diag weight) ---
    # TODO(synk): reference Encoder/Decoder are 4-layer transformers (num_head=4,
    # ff_dim=1024, dropout=0.1); internals not provided, synthesized as MLPs.
    proj = jnp.dot(emb_tx, win_ref[...], preferred_element_type=f32)  # [B*S, 256]
    h = jnp.maximum(proj[:, :H_ENC] + bias[0:1, :], 0.0)              # [B*S, H_ENC]
    txh = proj[:, H_ENC:]                                             # [B*S, H_DEC]

    # ---- masked mean pooling (VPU/XLU; replaces pmat matmul) ----------------
    hm = h * mcol                                                     # [B*S, H_ENC]
    pooled_sum = jnp.sum(hm.reshape(B, S, H_ENC), axis=1)             # [B, H_ENC]
    counts = jnp.sum(mcol.reshape(B, S, 1), axis=1)                   # [B, 1]
    inv_counts = pl.reciprocal(jnp.maximum(counts, 1.0), approx=True)
    pooled = pooled_sum * inv_counts                                  # [B, H_ENC]

    # ---- fused mu/logvar heads (single MXU push) ----------------------------
    mulv = jnp.dot(pooled, wmulv_ref[...], preferred_element_type=f32) + bias[1:2, :]
    mu = mulv[:, :LATENT]                                             # [B, LATENT]
    logvar = mulv[:, LATENT:]                                         # [B, LATENT]

    # ---- reparameterize: z = mu + exp(0.5*logvar) * eps ---------------------
    z = mu + jnp.exp(0.5 * logvar) * eps_ref[...]                     # [B, LATENT]

    # ---- fused decoder z-proj + CNF layer-1 (single MXU push) ---------------
    zc = jnp.dot(z, wzc1_ref[...], preferred_element_type=f32)        # [B, 256]
    zp = jnp.maximum(zc[:, :H_DEC] + bias[2:3, :], 0.0)               # [B, H_DEC]
    hc = jnp.tanh(zc[:, H_DEC:] + bias[3:4, :])                       # [B, H_CNF]

    # ---- decoder: broadcast z-proj rows over the sequence (replaces rmat) ---
    # TODO(synk): reconstruction MSE averages over all B*S tokens (mask only
    # used for pooling), as the reference Decoder's masking is unspecified.
    zrep = jnp.broadcast_to(zp[:, None, :], (B, S, H_DEC)).reshape(B * S, H_DEC)
    hdec = jnp.maximum(txh + zrep, 0.0)
    yhat = jnp.dot(hdec, wout_ref[...], preferred_element_type=f32) + bias[4:5, :IN1]
    diff = yhat - ty
    reconstruction_loss = jnp.mean(diff * diff)

    # ---- gaussian_entropy -> entropy_loss -----------------------------------
    const = 0.5 * float(LATENT) * (1.0 + math.log(math.pi * 2.0))
    ent = 0.5 * jnp.sum(logvar, axis=-1, keepdims=True) + const       # [B, 1]
    entropy_loss = -jnp.mean(ent)

    # ---- CNF: single Euler step with analytic divergence --------------------
    # TODO(synk): reference uses adaptive dopri5 ODE solve with adjoint; no
    # clean Pallas equivalent — approximated with one explicit Euler step and
    # exact (analytic) Jacobian trace of the 2-layer tanh ODEnet.
    fz = jnp.dot(hc, wc2_ref[...], preferred_element_type=f32) + bias[5:6, :LATENT]
    w = z + CNF_T * fz                                                # [B, LATENT]
    tr_j = jnp.sum((1.0 - hc * hc) * bias[6:7, :], axis=-1, keepdims=True)  # [B,1]
    delta_log_pw = -CNF_T * tr_j                                      # [B, 1]

    # stdnormal_logprob(w):  -0.5*D*log(2*pi) - sum(w^2)/2   (keepdim)
    log_pw = (-0.5 * float(LATENT) * math.log(2.0 * math.pi)) - 0.5 * jnp.sum(
        w * w, axis=-1, keepdims=True
    )
    log_pz = log_pw - delta_log_pw
    prior_loss = -jnp.mean(log_pz)

    out_ref[0] = reconstruction_loss
    out_ref[1] = entropy_loss
    out_ref[2] = prior_loss
    out_ref[3] = jnp.zeros((), jnp.float32)  # condition_dim == 0 branch


# ----------------------------- weight packing ------------------------------- #
def pack_params(params):
    """One-time packing of the 16 raw parameter tensors into 6 kernel slabs."""
    f32 = jnp.float32

    # block-diag(enc_w, dec_txw) so the encoder in-proj and decoder token_x
    # projection fuse into a single [B*S, 256]-wide MXU push.
    win = jnp.zeros((E + IN0, H_ENC + H_DEC), f32)
    win = win.at[:E, :H_ENC].set(params["enc_w"])
    win = win.at[E:, H_ENC:].set(params["dec_txw"])

    wmulv = jnp.concatenate([params["mu_w"], params["lv_w"]], axis=1)    # [H_ENC, 2*LATENT]
    wzc1 = jnp.concatenate([params["dec_zw"], params["cnf_w1"]], axis=1)  # [LATENT, H_DEC+H_CNF]

    # analytic trace coefficients of the ODEnet Jacobian: c_j = sum_i W1[i,j]*W2[j,i]
    ctr = jnp.sum(params["cnf_w1"] * params["cnf_w2"].T, axis=0)          # [H_CNF]

    # single [8, 128] bias / coefficient slab (one vreg)
    bias = jnp.zeros((8, 128), f32)
    bias = bias.at[0, :H_ENC].set(params["enc_b"][0])
    bias = bias.at[1, :LATENT].set(params["mu_b"][0])
    bias = bias.at[1, LATENT : 2 * LATENT].set(params["lv_b"][0])
    bias = bias.at[2, :H_DEC].set(params["dec_zb"][0])
    bias = bias.at[3, :H_CNF].set(params["cnf_b1"][0])
    bias = bias.at[4, :IN1].set(params["dec_ob"][0])
    bias = bias.at[5, :LATENT].set(params["cnf_b2"][0])
    bias = bias.at[6, :H_CNF].set(ctr)

    return {
        "win": win,
        "wmulv": wmulv,
        "wzc1": wzc1,
        "wout": params["dec_ow"].astype(f32),
        "wc2": params["cnf_w2"].astype(f32),
        "bias": bias,
    }


# ------------------------------- the wrapper -------------------------------- #
@jax.jit
def cvaef_forward(packed, data, eps):
    """data = (emb, emb_mask, token_x, token_y, condition_y); emb_mask: 1.0 = valid."""
    emb, emb_mask, token_x, token_y, _condition_y = data
    f32 = jnp.float32

    emb2d = emb.reshape(B * S, E).astype(f32)
    tx2d = token_x.reshape(B * S, IN0).astype(f32)
    ty2d = token_y.reshape(B * S, IN1).astype(f32)
    mcol = emb_mask.astype(f32).reshape(B * S, 1)
    data_slab = jnp.concatenate([emb2d, tx2d, ty2d, mcol], axis=1)   # [B*S, DCOLS]

    inputs = (
        data_slab,
        eps.astype(f32),
        packed["win"],
        packed["wmulv"],
        packed["wzc1"],
        packed["wout"],
        packed["wc2"],
        packed["bias"],
    )

    losses = pl.pallas_call(
        cvaef_kernel,
        out_shape=jax.ShapeDtypeStruct((4,), jnp.float32),
        in_specs=[pl.BlockSpec(memory_space=pltpu.MemorySpace.VMEM)] * len(inputs),
        out_specs=pl.BlockSpec(memory_space=pltpu.MemorySpace.SMEM),
    )(*inputs)

    reconstruction_loss = losses[0]
    entropy_loss = losses[1]
    prior_loss = losses[2]
    condition_loss = losses[3:4]  # matches torch.zeros(1) shape when condition_dim == 0
    return reconstruction_loss, entropy_loss, prior_loss, condition_loss


def init_params(key):
    ks = jax.random.split(key, 12)

    def w(k, shape, scale=0.05):
        return jax.random.normal(k, shape, jnp.float32) * scale

    return {
        "enc_w": w(ks[0], (E, H_ENC)),
        "enc_b": jnp.zeros((1, H_ENC), jnp.float32),
        "mu_w": w(ks[1], (H_ENC, LATENT)),
        "mu_b": jnp.zeros((1, LATENT), jnp.float32),
        "lv_w": w(ks[2], (H_ENC, LATENT)),
        "lv_b": jnp.zeros((1, LATENT), jnp.float32),
        "dec_zw": w(ks[3], (LATENT, H_DEC)),
        "dec_zb": jnp.zeros((1, H_DEC), jnp.float32),
        "dec_txw": w(ks[4], (IN0, H_DEC)),
        "dec_ow": w(ks[5], (H_DEC, IN1)),
        "dec_ob": jnp.zeros((1, IN1), jnp.float32),
        "cnf_w1": w(ks[6], (LATENT, H_CNF)),
        "cnf_b1": jnp.zeros((1, H_CNF), jnp.float32),
        "cnf_w2": w(ks[7], (H_CNF, LATENT)),
        "cnf_b2": jnp.zeros((1, LATENT), jnp.float32),
    }


if __name__ == "__main__":
    key = jax.random.PRNGKey(0)
    k_param, k_emb, k_tx, k_ty, k_eps = jax.random.split(key, 5)

    params = init_params(k_param)
    packed = pack_params(params)  # one-time weight packing (not per call)

    emb = jax.random.normal(k_emb, (B, S, E), jnp.float32)
    emb_mask = jnp.ones((B, S), jnp.float32).at[1, S - 2 :].set(0.0)  # 1.0 = valid
    token_x = jax.random.normal(k_tx, (B, S, IN0), jnp.float32)
    token_y = jax.random.normal(k_ty, (B, S, IN1), jnp.float32)
    condition_y = jnp.zeros((B, 1), jnp.float32)  # unused (condition_dim == 0)
    eps = jax.random.normal(k_eps, (B, LATENT), jnp.float32)  # reparam noise

    data = (emb, emb_mask, token_x, token_y, condition_y)
    out = cvaef_forward(packed, data, eps)
    out = jax.block_until_ready(out)

    recon, ent, prior, cond = out
    assert all(bool(jnp.isfinite(x).all()) for x in (recon, ent, prior, cond))
    print("KERNEL_OK")
</pallas_src>

<mosaic_0001>
module attributes {stable_mosaic.version = 11 : i64} {
  func.func @cvaef_kernel(%arg0: memref<16x33xf32, #tpu.memory_space<vmem>>, %arg1: memref<2x64xf32, #tpu.memory_space<vmem>>, %arg2: memref<24x256xf32, #tpu.memory_space<vmem>>, %arg3: memref<128x128xf32, #tpu.memory_space<vmem>>, %arg4: memref<64x256xf32, #tpu.memory_space<vmem>>, %arg5: memref<128x8xf32, #tpu.memory_space<vmem>>, %arg6: memref<128x64xf32, #tpu.memory_space<vmem>>, %arg7: memref<8x128xf32, #tpu.memory_space<vmem>>, %arg8: memref<4xf32, #tpu.memory_space<smem>>) attributes {dimension_semantics = [], scalar_prefetch = 0 : i64, scratch_operands = 0 : i64, tpu.core_type = #tpu.core_type<tc>} {
    %c0 = arith.constant 0 : index
    %c0_0 = arith.constant 0 : index
    %0 = vector.load %arg0[%c0, %c0_0] : memref<16x33xf32, #tpu.memory_space<vmem>>, vector<16x33xf32>
    %1 = vector.extract_strided_slice %0 {offsets = [0, 0], sizes = [16, 24], strides = [1, 1]} : vector<16x33xf32> to vector<16x24xf32>
    %2 = vector.extract_strided_slice %0 {offsets = [0, 24], sizes = [16, 8], strides = [1, 1]} : vector<16x33xf32> to vector<16x8xf32>
    %3 = vector.extract_strided_slice %0 {offsets = [0, 32], sizes = [16, 1], strides = [1, 1]} : vector<16x33xf32> to vector<16x1xf32>
    %c0_1 = arith.constant 0 : index
    %c0_2 = arith.constant 0 : index
    %4 = vector.load %arg7[%c0_1, %c0_2] : memref<8x128xf32, #tpu.memory_space<vmem>>, vector<8x128xf32>
    %c0_3 = arith.constant 0 : index
    %c0_4 = arith.constant 0 : index
    %5 = vector.load %arg2[%c0_3, %c0_4] : memref<24x256xf32, #tpu.memory_space<vmem>>, vector<24x256xf32>
    %cst = arith.constant dense<0.000000e+00> : vector<16x256xf32>
    %6 = tpu.matmul %1, %5, %cst {dimension_numbers = #tpu.dot_dimension_numbers<[1], [0], [0], [1], [0, 0, 1, 1], [], []>} : vector<16x24xf32>, vector<24x256xf32>, vector<16x256xf32> -> vector<16x256xf32>
    %7 = vector.extract_strided_slice %6 {offsets = [0, 0], sizes = [16, 128], strides = [1, 1]} : vector<16x256xf32> to vector<16x128xf32>
    %8 = vector.extract_strided_slice %4 {offsets = [0, 0], sizes = [1, 128], strides = [1, 1]} : vector<8x128xf32> to vector<1x128xf32>
    %9 = vector.broadcast %8 : vector<1x128xf32> to vector<16x128xf32>
    %10 = arith.addf %7, %9 : vector<16x128xf32>
    %cst_5 = arith.constant 0.000000e+00 : f32
    %11 = vector.broadcast %cst_5 : f32 to vector<16x128xf32>
    %12 = arith.maximumf %10, %11 : vector<16x128xf32>
    %13 = vector.extract_strided_slice %6 {offsets = [0, 128], sizes = [16, 128], strides = [1, 1]} : vector<16x256xf32> to vector<16x128xf32>
    %14 = vector.broadcast %3 : vector<16x1xf32> to vector<16x128xf32>
    %15 = arith.mulf %12, %14 : vector<16x128xf32>
    %16 = vector.shape_cast %15 : vector<16x128xf32> to vector<2x8x128xf32>
    %cst_6 = arith.constant dense<0.000000e+00> : vector<2x128xf32>
    %17 = vector.multi_reduction <add>, %16, %cst_6 [1] : vector<2x8x128xf32> to vector<2x128xf32>
    %18 = vector.shape_cast %3 : vector<16x1xf32> to vector<2x8x1xf32>
    %cst_7 = arith.constant dense<0.000000e+00> : vector<2x1xf32>
    %19 = vector.multi_reduction <add>, %18, %cst_7 [1] : vector<2x8x1xf32> to vector<2x1xf32>
    %cst_8 = arith.constant 1.000000e+00 : f32
    %20 = vector.broadcast %cst_8 : f32 to vector<2x1xf32>
    %21 = arith.maximumf %19, %20 : vector<2x1xf32>
    %22 = tpu.reciprocal %21 {approx = true} : vector<2x1xf32> -> vector<2x1xf32>
    %23 = vector.broadcast %22 : vector<2x1xf32> to vector<2x128xf32>
    %24 = arith.mulf %17, %23 : vector<2x128xf32>
    %c0_9 = arith.constant 0 : index
    %c0_10 = arith.constant 0 : index
    %25 = vector.load %arg3[%c0_9, %c0_10] : memref<128x128xf32, #tpu.memory_space<vmem>>, vector<128x128xf32>
    %cst_11 = arith.constant dense<0.000000e+00> : vector<2x128xf32>
    %26 = tpu.matmul %24, %25, %cst_11 {dimension_numbers = #tpu.dot_dimension_numbers<[1], [0], [0], [1], [0, 0, 1, 1], [], []>} : vector<2x128xf32>, vector<128x128xf32>, vector<2x128xf32> -> vector<2x128xf32>
    %27 = vector.extract_strided_slice %4 {offsets = [1, 0], sizes = [1, 128], strides = [1, 1]} : vector<8x128xf32> to vector<1x128xf32>
    %28 = vector.broadcast %27 : vector<1x128xf32> to vector<2x128xf32>
    %29 = arith.addf %26, %28 : vector<2x128xf32>
    %30 = vector.extract_strided_slice %29 {offsets = [0, 0], sizes = [2, 64], strides = [1, 1]} : vector<2x128xf32> to vector<2x64xf32>
    %31 = vector.extract_strided_slice %29 {offsets = [0, 64], sizes = [2, 64], strides = [1, 1]} : vector<2x128xf32> to vector<2x64xf32>
    %cst_12 = arith.constant 5.000000e-01 : f32
    %32 = vector.broadcast %cst_12 : f32 to vector<2x64xf32>
    %33 = arith.mulf %32, %31 : vector<2x64xf32>
    %34 = math.exp %33 : vector<2x64xf32>
    %c0_13 = arith.constant 0 : index
    %c0_14 = arith.constant 0 : index
    %35 = vector.load %arg1[%c0_13, %c0_14] : memref<2x64xf32, #tpu.memory_space<vmem>>, vector<2x64xf32>
    %36 = arith.mulf %34, %35 : vector<2x64xf32>
    %37 = arith.addf %30, %36 : vector<2x64xf32>
    %c0_15 = arith.constant 0 : index
    %c0_16 = arith.constant 0 : index
    %38 = vector.load %arg4[%c0_15, %c0_16] : memref<64x256xf32, #tpu.memory_space<vmem>>, vector<64x256xf32>
    %cst_17 = arith.constant dense<0.000000e+00> : vector<2x256xf32>
    %39 = tpu.matmul %37, %38, %cst_17 {dimension_numbers = #tpu.dot_dimension_numbers<[1], [0], [0], [1], [0, 0, 1, 1], [], []>} : vector<2x64xf32>, vector<64x256xf32>, vector<2x256xf32> -> vector<2x256xf32>
    %40 = vector.extract_strided_slice %39 {offsets = [0, 0], sizes = [2, 128], strides = [1, 1]} : vector<2x256xf32> to vector<2x128xf32>
    %41 = vector.extract_strided_slice %4 {offsets = [2, 0], sizes = [1, 128], strides = [1, 1]} : vector<8x128xf32> to vector<1x128xf32>
    %42 = vector.broadcast %41 : vector<1x128xf32> to vector<2x128xf32>
    %43 = arith.addf %40, %42 : vector<2x128xf32>
    %cst_18 = arith.constant 0.000000e+00 : f32
    %44 = vector.broadcast %cst_18 : f32 to vector<2x128xf32>
    %45 = arith.maximumf %43, %44 : vector<2x128xf32>
    %46 = vector.extract_strided_slice %39 {offsets = [0, 128], sizes = [2, 128], strides = [1, 1]} : vector<2x256xf32> to vector<2x128xf32>
    %47 = vector.extract_strided_slice %4 {offsets = [3, 0], sizes = [1, 128], strides = [1, 1]} : vector<8x128xf32> to vector<1x128xf32>
    %48 = vector.broadcast %47 : vector<1x128xf32> to vector<2x128xf32>
    %49 = arith.addf %46, %48 : vector<2x128xf32>
    %50 = math.tanh %49 : vector<2x128xf32>
    %51 = vector.shape_cast %45 : vector<2x128xf32> to vector<2x1x128xf32>
    %52 = vector.shape_cast %51 : vector<2x1x128xf32> to vector<2x1x128xf32>
    %53 = vector.broadcast %52 : vector<2x1x128xf32> to vector<2x8x128xf32>
    %54 = vector.shape_cast %53 : vector<2x8x128xf32> to vector<16x128xf32>
    %55 = arith.addf %13, %54 : vector<16x128xf32>
    %cst_19 = arith.constant 0.000000e+00 : f32
    %56 = vector.broadcast %cst_19 : f32 to vector<16x128xf32>
    %57 = arith.maximumf %55, %56 : vector<16x128xf32>
    %c0_20 = arith.constant 0 : index
    %c0_21 = arith.constant 0 : index
    %58 = vector.load %arg5[%c0_20, %c0_21] : memref<128x8xf32, #tpu.memory_space<vmem>>, vector<128x8xf32>
    %cst_22 = arith.constant dense<0.000000e+00> : vector<16x8xf32>
    %59 = tpu.matmul %57, %58, %cst_22 {dimension_numbers = #tpu.dot_dimension_numbers<[1], [0], [0], [1], [0, 0, 1, 1], [], []>} : vector<16x128xf32>, vector<128x8xf32>, vector<16x8xf32> -> vector<16x8xf32>
    %60 = vector.extract_strided_slice %4 {offsets = [4, 0], sizes = [1, 8], strides = [1, 1]} : vector<8x128xf32> to vector<1x8xf32>
    %61 = vector.broadcast %60 : vector<1x8xf32> to vector<16x8xf32>
    %62 = arith.addf %59, %61 : vector<16x8xf32>
    %63 = arith.subf %62, %2 : vector<16x8xf32>
    %64 = arith.mulf %63, %63 : vector<16x8xf32>
    %65 = vector.shape_cast %64 : vector<16x8xf32> to vector<1x16x8xf32>
    %cst_23 = arith.constant dense<0.000000e+00> : vector<1xf32>
    %66 = vector.multi_reduction <add>, %65, %cst_23 [1, 2] : vector<1x16x8xf32> to vector<1xf32>
    %67 = vector.shape_cast %66 : vector<1xf32> to vector<1x1x1xf32>
    %68 = vector.extract %67[0, 0, 0] : f32 from vector<1x1x1xf32>
    %cst_24 = arith.constant 1.280000e+02 : f32
    %69 = arith.divf %68, %cst_24 : f32
    %cst_25 = arith.constant dense<0.000000e+00> : vector<2xf32>
    %70 = vector.multi_reduction <add>, %31, %cst_25 [1] : vector<2x64xf32> to vector<2xf32>
    %71 = vector.shape_cast %70 : vector<2xf32> to vector<2x1xf32>
    %cst_26 = arith.constant 5.000000e-01 : f32
    %72 = vector.broadcast %cst_26 : f32 to vector<2x1xf32>
    %73 = arith.mulf %72, %71 : vector<2x1xf32>
    %cst_27 = arith.constant 90.8120651 : f32
    %74 = vector.broadcast %cst_27 : f32 to vector<2x1xf32>
    %75 = arith.addf %73, %74 : vector<2x1xf32>
    %76 = vector.shape_cast %75 : vector<2x1xf32> to vector<1x2x1xf32>
    %cst_28 = arith.constant dense<0.000000e+00> : vector<1xf32>
    %77 = vector.multi_reduction <add>, %76, %cst_28 [1, 2] : vector<1x2x1xf32> to vector<1xf32>
    %78 = vector.shape_cast %77 : vector<1xf32> to vector<1x1x1xf32>
    %79 = vector.extract %78[0, 0, 0] : f32 from vector<1x1x1xf32>
    %cst_29 = arith.constant 2.000000e+00 : f32
    %80 = arith.divf %79, %cst_29 : f32
    %cst_30 = arith.constant 0.000000e+00 : f32
    %81 = arith.subf %cst_30, %80 : f32
    %c0_31 = arith.constant 0 : index
    %c0_32 = arith.constant 0 : index
    %82 = vector.load %arg6[%c0_31, %c0_32] : memref<128x64xf32, #tpu.memory_space<vmem>>, vector<128x64xf32>
    %cst_33 = arith.constant dense<0.000000e+00> : vector<2x64xf32>
    %83 = tpu.matmul %50, %82, %cst_33 {dimension_numbers = #tpu.dot_dimension_numbers<[1], [0], [0], [1], [0, 0, 1, 1], [], []>} : vector<2x128xf32>, vector<128x64xf32>, vector<2x64xf32> -> vector<2x64xf32>
    %84 = vector.extract_strided_slice %4 {offsets = [5, 0], sizes = [1, 64], strides = [1, 1]} : vector<8x128xf32> to vector<1x64xf32>
    %85 = vector.broadcast %84 : vector<1x64xf32> to vector<2x64xf32>
    %86 = arith.addf %83, %85 : vector<2x64xf32>
    %cst_34 = arith.constant 1.000000e+00 : f32
    %87 = vector.broadcast %cst_34 : f32 to vector<2x64xf32>
    %88 = arith.mulf %87, %86 : vector<2x64xf32>
    %89 = arith.addf %37, %88 : vector<2x64xf32>
    %90 = arith.mulf %50, %50 : vector<2x128xf32>
    %cst_35 = arith.constant 1.000000e+00 : f32
    %91 = vector.broadcast %cst_35 : f32 to vector<2x128xf32>
    %92 = arith.subf %91, %90 : vector<2x128xf32>
    %93 = vector.extract_strided_slice %4 {offsets = [6, 0], sizes = [1, 128], strides = [1, 1]} : vector<8x128xf32> to vector<1x128xf32>
    %94 = vector.broadcast %93 : vector<1x128xf32> to vector<2x128xf32>
    %95 = arith.mulf %92, %94 : vector<2x128xf32>
    %cst_36 = arith.constant dense<0.000000e+00> : vector<2xf32>
    %96 = vector.multi_reduction <add>, %95, %cst_36 [1] : vector<2x128xf32> to vector<2xf32>
    %97 = vector.shape_cast %96 : vector<2xf32> to vector<2x1xf32>
    %cst_37 = arith.constant -1.000000e+00 : f32
    %98 = vector.broadcast %cst_37 : f32 to vector<2x1xf32>
    %99 = arith.mulf %98, %97 : vector<2x1xf32>
    %100 = arith.mulf %89, %89 : vector<2x64xf32>
    %cst_38 = arith.constant dense<0.000000e+00> : vector<2xf32>
    %101 = vector.multi_reduction <add>, %100, %cst_38 [1] : vector<2x64xf32> to vector<2xf32>
    %102 = vector.shape_cast %101 : vector<2xf32> to vector<2x1xf32>
    %cst_39 = arith.constant 5.000000e-01 : f32
    %103 = vector.broadcast %cst_39 : f32 to vector<2x1xf32>
    %104 = arith.mulf %103, %102 : vector<2x1xf32>
    %cst_40 = arith.constant -58.8120651 : f32
    %105 = vector.broadcast %cst_40 : f32 to vector<2x1xf32>
    %106 = arith.subf %105, %104 : vector<2x1xf32>
    %107 = arith.subf %106, %99 : vector<2x1xf32>
    %108 = vector.shape_cast %107 : vector<2x1xf32> to vector<1x2x1xf32>
    %cst_41 = arith.constant dense<0.000000e+00> : vector<1xf32>
    %109 = vector.multi_reduction <add>, %108, %cst_41 [1, 2] : vector<1x2x1xf32> to vector<1xf32>
    %110 = vector.shape_cast %109 : vector<1xf32> to vector<1x1x1xf32>
    %111 = vector.extract %110[0, 0, 0] : f32 from vector<1x1x1xf32>
    %cst_42 = arith.constant 2.000000e+00 : f32
    %112 = arith.divf %111, %cst_42 : f32
    %cst_43 = arith.constant 0.000000e+00 : f32
    %113 = arith.subf %cst_43, %112 : f32
    %c0_44 = arith.constant 0 : index
    %114 = memref.load %arg8[%c0_44] : memref<4xf32, #tpu.memory_space<smem>>
    memref.store %69, %arg8[%c0_44] : memref<4xf32, #tpu.memory_space<smem>>
    %c1 = arith.constant 1 : index
    %115 = memref.load %arg8[%c1] : memref<4xf32, #tpu.memory_space<smem>>
    memref.store %81, %arg8[%c1] : memref<4xf32, #tpu.memory_space<smem>>
    %c2 = arith.constant 2 : index
    %116 = memref.load %arg8[%c2] : memref<4xf32, #tpu.memory_space<smem>>
    memref.store %113, %arg8[%c2] : memref<4xf32, #tpu.memory_space<smem>>
    %cst_45 = arith.constant 0.000000e+00 : f32
    %c3 = arith.constant 3 : index
    %117 = memref.load %arg8[%c3] : memref<4xf32, #tpu.memory_space<smem>>
    memref.store %cst_45, %arg8[%c3] : memref<4xf32, #tpu.memory_space<smem>>
    return
  }
}

</mosaic_0001>

<llo_original>
// kernel: cvaef_forward.1
$region0: #{cvaef_forward.1}
  #allocation0 [shape = 'u32[]', space=smem, size = 0x4, offset = 0x4, fixed_abs, tag = 'smem constant byte address 0x4 - core index']
  #allocation1 [shape = 'u32[144,128]{1,0:T(1,128)}', space=vmem, size = 0x12000, scoped, tag = 'internal scratch']
  %s0 = inlined_call_operand.vmem [shape: f32[16,33], index: 0, kind: input, shape index: {}]
  %s1 = inlined_call_operand.vmem [shape: f32[2,64], index: 1, kind: input, shape index: {}]
  %s2 = inlined_call_operand.vmem [shape: f32[24,256], index: 2, kind: input, shape index: {}]
  %s3 = inlined_call_operand.vmem [shape: f32[128,128], index: 3, kind: input, shape index: {}]
  %s4 = inlined_call_operand.vmem [shape: f32[64,256], index: 4, kind: input, shape index: {}]
  %s5 = inlined_call_operand.vmem [shape: f32[128,8], index: 5, kind: input, shape index: {}]
  %s6 = inlined_call_operand.vmem [shape: f32[128,64], index: 6, kind: input, shape index: {}]
  %s7 = inlined_call_operand.vmem [shape: f32[8,128], index: 7, kind: input, shape index: {}]
  %s8 = inlined_call_operand.vmem [shape: f32[4], index: 8, kind: output, shape index: {}]
  %s9 = sld [smem:[#allocation0]]
  $region42: #{cvaef_forward.1} parent=0
    _
  %s11 = ssub.s32 1, %s9
  %s12 = scalar_select 0, %s11, %s9
  $region1: #{cvaef_forward.1} parent=0
    #allocation2 [shape = 'u8[512]{0}', space=smem, size = 0x200, scoped, tag = 'output window, operand 0, single buffered']
    #allocation3 [shape = 's32[1]{0}', space=sflag, size = 0x4, scoped, tag = 'scoped memory for cvaef_forward.1']
    %13 = vsyncpa [#allocation3], 0
    // Predicated region
    $region2: #{cvaef_forward.1} parent=1 // pred_check
      _
    $region3: #{cvaef_forward.1} parent=1 // pred_check_branch
      %15 = sbr.rel (0) target = $region5
    $region4: #{cvaef_forward.1} parent=1 // pred_region
      _
    $region5: #{cvaef_forward.1} parent=1 // pred_fallthru
      _
    // Predicated region
    $region6: #{cvaef_forward.1} parent=1 // pred_check
      _
    $region7: #{cvaef_forward.1} parent=1 // pred_check_branch
      %17 = sbr.rel (0) target = $region9
    $region8: #{cvaef_forward.1} parent=1 // pred_region
      _
    $region9: #{cvaef_forward.1} parent=1 // pred_fallthru
      _
    // Predicated region
    $region10: #{cvaef_forward.1} parent=1 // pred_check
      _
    $region11: #{cvaef_forward.1} parent=1 // pred_check_branch
      %19 = sbr.rel (0) target = $region13
    $region12: #{cvaef_forward.1} parent=1 // pred_region
      _
    $region13: #{cvaef_forward.1} parent=1 // pred_fallthru
      _
    // Predicated region
    $region14: #{cvaef_forward.1} parent=1 // pred_check
      _
    $region15: #{cvaef_forward.1} parent=1 // pred_check_branch
      %21 = sbr.rel (0) target = $region17
    $region16: #{cvaef_forward.1} parent=1 // pred_region
      _
    $region17: #{cvaef_forward.1} parent=1 // pred_fallthru
      _
    // Predicated region
    $region18: #{cvaef_forward.1} parent=1 // pred_check
      _
    $region19: #{cvaef_forward.1} parent=1 // pred_check_branch
      %23 = sbr.rel (0) target = $region21
    $region20: #{cvaef_forward.1} parent=1 // pred_region
      _
    $region21: #{cvaef_forward.1} parent=1 // pred_fallthru
      _
    // Predicated region
    $region22: #{cvaef_forward.1} parent=1 // pred_check
      _
    $region23: #{cvaef_forward.1} parent=1 // pred_check_branch
      %25 = sbr.rel (0) target = $region25
    $region24: #{cvaef_forward.1} parent=1 // pred_region
      _
    $region25: #{cvaef_forward.1} parent=1 // pred_fallthru
      _
    // Predicated region
    $region26: #{cvaef_forward.1} parent=1 // pred_check
      _
    $region27: #{cvaef_forward.1} parent=1 // pred_check_branch
      %27 = sbr.rel (0) target = $region29
    $region28: #{cvaef_forward.1} parent=1 // pred_region
      _
    $region29: #{cvaef_forward.1} parent=1 // pred_fallthru
      _
    // Predicated region
    $region30: #{cvaef_forward.1} parent=1 // pred_check
      _
    $region31: #{cvaef_forward.1} parent=1 // pred_check_branch
      %29 = sbr.rel (0) target = $region33
    $region32: #{cvaef_forward.1} parent=1 // pred_region
      _
    $region33: #{cvaef_forward.1} parent=1 // pred_fallthru
      _
    %v30 = vld [vmem:[%s0] sm:$0xff]
    %v31 = vld [vmem:[%s0 + $0x8] sm:$0xff]
    %v32 = vld [vmem:[%s7] sm:$0xff]
    %v33 = vld [vmem:[%s2] sm:$0xff]
    %v34 = vld [vmem:[%s2 + $0x8] sm:$0xff]
    %v35 = vld [vmem:[%s2 + $0x10] sm:$0xff]
    %v36 = vld [vmem:[%s2 + $0x18] sm:$0xff]
    %v37 = vld [vmem:[%s2 + $0x20] sm:$0xff]
    %v38 = vld [vmem:[%s2 + $0x28] sm:$0xff]
    %vm39 = vcmask 195584
    %v41 = vsel %vm39, %v30, 0
    %v44 = vsel %vm39, %v31, 0
    %46 = vmatprep.subr.mxu0 %v34
    %47 = vmatpush1.msra.mxu0 %v33
    %48 = vmatprep.subr.mxu0 %v36
    %49 = vmatpush1.msra.mxu0 %v35
    %50 = vmatprep.subr.mxu0 %v38
    %51 = vmatpush1.msra.mxu0 %v37
    %52 = vmatprep.subr.mxu0 0.0
    %53 = vmatpush1.msra.mxu0 0.0
    %54 = vmatprep.subr.mxu0 0.0
    %55 = vmatpush1.msra.mxu0 0.0
    %56 = vmatprep.subr.mxu0 0.0
    %57 = vmatpush1.msra.mxu0 0.0
    %58 = vmatprep.subr.mxu0 0.0
    %59 = vmatpush1.msra.mxu0 0.0
    %60 = vmatprep.subr.mxu0 0.0
    %61 = vmatpush1.msra.mxu0 0.0
    %62 = vmatprep.subr.mxu0 0.0
    %63 = vmatpush1.msra.mxu0 0.0
    %64 = vmatprep.subr.mxu0 0.0
    %65 = vmatpush1.msra.mxu0 0.0
    %66 = vmatprep.subr.mxu0 0.0
    %67 = vmatpush1.msra.mxu0 0.0
    %68 = vmatprep.subr.mxu0 0.0
    %69 = vmatpush1.msra.mxu0 0.0
    %70 = vmatprep.subr.mxu0 0.0
    %71 = vmatpush1.msra.mxu0 0.0
    %72 = vmatprep.subr.mxu0 0.0
    %73 = vmatpush1.msra.mxu0 0.0
    %74 = vmatprep.subr.mxu0 0.0
    %75 = vmatpush1.msra.mxu0 0.0
    %76 = vmatprep.subr.mxu0 0.0
    %77 = vmatpush1.msra.mxu0 0.0
    %78 = vmatprep.subr.mxu0 0.0
    %79 = vmatpush1.msra.mxu0 0.0
    %80 = vmatprep.subr.mxu0 0.0
    %81 = vmatpush1.msra.mxu0 0.0
    %82 = vmatprep.subr.mxu0 0.0
    %83 = vmatpush1.msra.mxu0 0.0
    %84 = vmatprep.subr.mxu0 0.0
    %85 = vmatpush1.msra.mxu0 0.0
    %86 = vmatprep.subr.mxu0 0.0
    %87 = vmatpush1.msra.mxu0 0.0
    %88 = vmatprep.subr.mxu0 0.0
    %89 = vmatpush1.msra.mxu0 0.0
    %90 = vmatprep.subr.mxu0 0.0
    %91 = vmatpush1.msra.mxu0 0.0
    %92 = vmatprep.subr.mxu0 0.0
    %93 = vmatpush1.msra.mxu0 0.0
    %94 = vmatprep.subr.mxu0 0.0
    %95 = vmatpush1.msra.mxu0 0.0
    %96 = vmatprep.subr.mxu0 0.0
    %97 = vmatpush1.msra.mxu0 0.0
    %98 = vmatprep.subr.mxu0 0.0
    %99 = vmatpush1.msra.mxu0 0.0
    %100 = vmatprep.subr.mxu0 0.0
    %101 = vmatpush1.msra.mxu0 0.0
    %102 = vmatprep.subr.mxu0 0.0
    %103 = vmatpush1.msra.mxu0 0.0
    %104 = vmatprep.subr.mxu0 0.0
    %105 = vmatpush1.msra.mxu0 0.0
    %106 = vmatprep.subr.mxu0 0.0
    %107 = vmatpush1.msra.mxu0 0.0
    %108 = vmatprep.subr.mxu0 0.0
    %109 = vmatpush1.msra.mxu0 0.0
    %110 = vmatprep.mubr.f32.mxu0 0.0
    %111 = vmatmul.mubr.f32.gmra.mrb[0].mxu0 %v41
    %v112 = vpop.f32.mrb[0].mxu0
    %v113 = vadd.f32 0.0, %v112
    %v114 = vpop.f32.mrb[0].mxu0
    %v115 = vadd.f32 0.0, %v114
    %116 = vmatprep.mubr.f32.mxu0 0.0
    %117 = vmatmul.mubr.f32.gmra.mrb[0].mxu0 %v44
    %v118 = vpop.f32.mrb[0].mxu0
    %v119 = vadd.f32 0.0, %v118
    %v120 = vpop.f32.mrb[0].mxu0
    %v121 = vadd.f32 0.0, %v120
    %122 = vdwg.mxu0
    %v123 = vlaneseq
    %v124 = vshrl.u32 %v123, 7
    %v125 = vsub.s32 0, %v124
    %v126 = vrot.slane %v32, %v125
    %v127 = vadd.f32 %v113, %v126
    %v128 = vadd.f32 %v119, %v126
    %v129 = vmax.f32 %v127, 0.0
    %v130 = vmax.f32 %v128, 0.0
    %131 = vset.pattern.permute.xlu0 32
    %132 = vperm.xlu0 %131, %v30
    %v133 = vpop.permute.xlu0 %132
    %135 = vset.pattern.permute.xlu0 32
    %136 = vperm.xlu0 %135, %v31
    %v137 = vpop.permute.xlu0 %136
    %v139 = vmul.f32 %v129, %v133
    %v140 = vmul.f32 %v130, %v137
    %v141 = vrot.slane %v139, 4
    %v142 = vadd.f32 %v139, %v141
    %v143 = vrot.slane %v142, 2
    %v144 = vadd.f32 %v142, %v143
    %v145 = vrot.slane %v144, 1
    %v146 = vadd.f32 %v144, %v145
    %v147 = vrot.slane %v140, 4
    %v148 = vadd.f32 %v140, %v147
    %v149 = vrot.slane %v148, 2
    %v150 = vadd.f32 %v148, %v149
    %v151 = vrot.slane %v150, 1
    %v152 = vadd.f32 %v150, %v151
    %vm153 = vcmask 269568
    %v154 = vsel %vm153, %v30, 0.0
    %v155 = vrot.slane %v154, 4
    %v156 = vadd.f32 %v154, %v155
    %v157 = vrot.slane %v156, 2
    %v158 = vadd.f32 %v156, %v157
    %v159 = vrot.slane %v158, 1
    %v160 = vadd.f32 %v158, %v159
    %v161 = vsel %vm153, %v31, 0.0
    %v162 = vrot.slane %v161, 4
    %v163 = vadd.f32 %v161, %v162
    %v164 = vrot.slane %v163, 2
    %v165 = vadd.f32 %v163, %v164
    %v166 = vrot.slane %v165, 1
    %v167 = vadd.f32 %v165, %v166
    %v168 = vmax.f32 %v160, 1.0
    %v169 = vmax.f32 %v167, 1.0
    %v170 = vrcp.pop %v168
    %v171 = vrcp.pop %v169
    %173 = vset.pattern.permute.xlu0 32
    %174 = vperm.xlu0 %173, %v170
    %v175 = vpop.permute.xlu0 %174
    %178 = vset.pattern.permute.xlu0 32
    %179 = vperm.xlu0 %178, %v171
    %v180 = vpop.permute.xlu0 %179
    %v182 = vmul.f32 %v146, %v175
    %v183 = vmul.f32 %v152, %v180
    %v184 = vld [vmem:[%s3] sm:$0xff]
    %v185 = vld [vmem:[%s3 + $0x8] sm:$0xff]
    %v186 = vld [vmem:[%s3 + $0x10] sm:$0xff]
    %v187 = vld [vmem:[%s3 + $0x18] sm:$0xff]
    %v188 = vld [vmem:[%s3 + $0x20] sm:$0xff]
    %v189 = vld [vmem:[%s3 + $0x28] sm:$0xff]
    %v190 = vld [vmem:[%s3 + $0x30] sm:$0xff]
    %v191 = vld [vmem:[%s3 + $0x38] sm:$0xff]
    %v192 = vld [vmem:[%s3 + $0x40] sm:$0xff]
    %v193 = vld [vmem:[%s3 + $0x48] sm:$0xff]
    %v194 = vld [vmem:[%s3 + $0x50] sm:$0xff]
    %v195 = vld [vmem:[%s3 + $0x58] sm:$0xff]
    %v196 = vld [vmem:[%s3 + $0x60] sm:$0xff]
    %v197 = vld [vmem:[%s3 + $0x68] sm:$0xff]
    %v198 = vld [vmem:[%s3 + $0x70] sm:$0xff]
    %v199 = vld [vmem:[%s3 + $0x78] sm:$0xff]
    %v200 = vlaneseq
    %v201 = vshrl.u32 %v200, 7
    %v202 = vsub.s32 1, %v201
    %v203 = vrot.slane %v32, %v202
    %vm206 = vcmask 1041409
    %v207 = vsel %vm206, %v183, %v182
    %209 = vmatprep.subr.mxu0 0.0
    %210 = vmatpush1.msra.mxu0 %v184
    %211 = vmatprep.subr.mxu0 0.0
    %212 = vmatpush1.msra.mxu0 %v185
    %213 = vmatprep.subr.mxu0 0.0
    %214 = vmatpush1.msra.mxu0 %v186
    %215 = vmatprep.subr.mxu0 0.0
    %216 = vmatpush1.msra.mxu0 %v187
    %217 = vmatprep.subr.mxu0 0.0
    %218 = vmatpush1.msra.mxu0 %v188
    %219 = vmatprep.subr.mxu0 0.0
    %220 = vmatpush1.msra.mxu0 %v189
    %221 = vmatprep.subr.mxu0 0.0
    %222 = vmatpush1.msra.mxu0 %v190
    %223 = vmatprep.subr.mxu0 0.0
    %224 = vmatpush1.msra.mxu0 %v191
    %225 = vmatprep.subr.mxu0 0.0
    %226 = vmatpush1.msra.mxu0 %v192
    %227 = vmatprep.subr.mxu0 0.0
    %228 = vmatpush1.msra.mxu0 %v193
    %229 = vmatprep.subr.mxu0 0.0
    %230 = vmatpush1.msra.mxu0 %v194
    %231 = vmatprep.subr.mxu0 0.0
    %232 = vmatpush1.msra.mxu0 %v195
    %233 = vmatprep.subr.mxu0 0.0
    %234 = vmatpush1.msra.mxu0 %v196
    %235 = vmatprep.subr.mxu0 0.0
    %236 = vmatpush1.msra.mxu0 %v197
    %237 = vmatprep.subr.mxu0 0.0
    %238 = vmatpush1.msra.mxu0 %v198
    %239 = vmatprep.subr.mxu0 0.0
    %240 = vmatpush1.msra.mxu0 %v199
    %241 = vmatprep.subr.mxu0 0.0
    %242 = vmatpush1.msra.mxu0 0.0
    %243 = vmatprep.subr.mxu0 0.0
    %244 = vmatpush1.msra.mxu0 0.0
    %245 = vmatprep.subr.mxu0 0.0
    %246 = vmatpush1.msra.mxu0 0.0
    %247 = vmatprep.subr.mxu0 0.0
    %248 = vmatpush1.msra.mxu0 0.0
    %249 = vmatprep.subr.mxu0 0.0
    %250 = vmatpush1.msra.mxu0 0.0
    %251 = vmatprep.subr.mxu0 0.0
    %252 = vmatpush1.msra.mxu0 0.0
    %253 = vmatprep.subr.mxu0 0.0
    %254 = vmatpush1.msra.mxu0 0.0
    %255 = vmatprep.subr.mxu0 0.0
    %256 = vmatpush1.msra.mxu0 0.0
    %257 = vmatprep.subr.mxu0 0.0
    %258 = vmatpush1.msra.mxu0 0.0
    %259 = vmatprep.subr.mxu0 0.0
    %260 = vmatpush1.msra.mxu0 0.0
    %261 = vmatprep.subr.mxu0 0.0
    %262 = vmatpush1.msra.mxu0 0.0
    %263 = vmatprep.subr.mxu0 0.0
    %264 = vmatpush1.msra.mxu0 0.0
    %265 = vmatprep.subr.mxu0 0.0
    %266 = vmatpush1.msra.mxu0 0.0
    %267 = vmatprep.subr.mxu0 0.0
    %268 = vmatpush1.msra.mxu0 0.0
    %269 = vmatprep.subr.mxu0 0.0
    %270 = vmatpush1.msra.mxu0 0.0
    %271 = vmatprep.subr.mxu0 0.0
    %272 = vmatpush1.msra.mxu0 0.0
    %273 = vmatprep.mubr.f32.mxu0 0.0
    %274 = vmatmul.mubr.f32.gmra.mrb[0].mxu0 %v207
    %v275 = vpop.f32.mrb[0].mxu0
    %v276 = vadd.f32 %v203, %v275
    %v277 = vpop.f32.mrb[0].mxu0
    %278 = vdwg.mxu0
    %v279 = vmul.f32 %v276, 0.5
    %v280 = vmul.f32 %v279, 1.442695
    %v281 = vpow.pop %v280
    %v282 = vld [vmem:[%s1] sm:$0x3]
    %284 = vrot.lane.b32.xlu0 %v282, 64
    %v285 = vpop.permute.xlu0 %284
    %v287 = vmul.f32 %v281, %v285
    %289 = vrot.lane.b32.xlu0 %v287, 64
    %v290 = vpop.permute.xlu0 %289
    %v292 = vadd.f32 %v276, %v290
    %v293 = vld [vmem:[%s4] sm:$0xff]
    %v294 = vld [vmem:[%s4 + $0x8] sm:$0xff]
    %v295 = vld [vmem:[%s4 + $0x10] sm:$0xff]
    %v296 = vld [vmem:[%s4 + $0x18] sm:$0xff]
    %v297 = vld [vmem:[%s4 + $0x20] sm:$0xff]
    %v298 = vld [vmem:[%s4 + $0x28] sm:$0xff]
    %v299 = vld [vmem:[%s4 + $0x30] sm:$0xff]
    %v300 = vld [vmem:[%s4 + $0x38] sm:$0xff]
    %v301 = vld [vmem:[%s4 + $0x40] sm:$0xff]
    %v302 = vld [vmem:[%s4 + $0x48] sm:$0xff]
    %v303 = vld [vmem:[%s4 + $0x50] sm:$0xff]
    %v304 = vld [vmem:[%s4 + $0x58] sm:$0xff]
    %v305 = vld [vmem:[%s4 + $0x60] sm:$0xff]
    %v306 = vld [vmem:[%s4 + $0x68] sm:$0xff]
    %v307 = vld [vmem:[%s4 + $0x70] sm:$0xff]
    %v308 = vld [vmem:[%s4 + $0x78] sm:$0xff]
    %vm309 = vcmask 523264
    %v311 = vsel %vm309, %v292, 0
    %313 = vmatprep.subr.mxu0 %v294
    %314 = vmatpush1.msra.mxu0 %v293
    %315 = vmatprep.subr.mxu0 %v296
    %316 = vmatpush1.msra.mxu0 %v295
    %317 = vmatprep.subr.mxu0 %v298
    %318 = vmatpush1.msra.mxu0 %v297
    %319 = vmatprep.subr.mxu0 %v300
    %320 = vmatpush1.msra.mxu0 %v299
    %321 = vmatprep.subr.mxu0 %v302
    %322 = vmatpush1.msra.mxu0 %v301
    %323 = vmatprep.subr.mxu0 %v304
    %324 = vmatpush1.msra.mxu0 %v303
    %325 = vmatprep.subr.mxu0 %v306
    %326 = vmatpush1.msra.mxu0 %v305
    %327 = vmatprep.subr.mxu0 %v308
    %328 = vmatpush1.msra.mxu0 %v307
    %329 = vmatprep.subr.mxu0 0.0
    %330 = vmatpush1.msra.mxu0 0.0
    %331 = vmatprep.subr.mxu0 0.0
    %332 = vmatpush1.msra.mxu0 0.0
    %333 = vmatprep.subr.mxu0 0.0
    %334 = vmatpush1.msra.mxu0 0.0
    %335 = vmatprep.subr.mxu0 0.0
    %336 = vmatpush1.msra.mxu0 0.0
    %337 = vmatprep.subr.mxu0 0.0
    %338 = vmatpush1.msra.mxu0 0.0
    %339 = vmatprep.subr.mxu0 0.0
    %340 = vmatpush1.msra.mxu0 0.0
    %341 = vmatprep.subr.mxu0 0.0
    %342 = vmatpush1.msra.mxu0 0.0
    %343 = vmatprep.subr.mxu0 0.0
    %344 = vmatpush1.msra.mxu0 0.0
    %345 = vmatprep.subr.mxu0 0.0
    %346 = vmatpush1.msra.mxu0 0.0
    %347 = vmatprep.subr.mxu0 0.0
    %348 = vmatpush1.msra.mxu0 0.0
    %349 = vmatprep.subr.mxu0 0.0
    %350 = vmatpush1.msra.mxu0 0.0
    %351 = vmatprep.subr.mxu0 0.0
    %352 = vmatpush1.msra.mxu0 0.0
    %353 = vmatprep.subr.mxu0 0.0
    %354 = vmatpush1.msra.mxu0 0.0
    %355 = vmatprep.subr.mxu0 0.0
    %356 = vmatpush1.msra.mxu0 0.0
    %357 = vmatprep.subr.mxu0 0.0
    %358 = vmatpush1.msra.mxu0 0.0
    %359 = vmatprep.subr.mxu0 0.0
    %360 = vmatpush1.msra.mxu0 0.0
    %361 = vmatprep.subr.mxu0 0.0
    %362 = vmatpush1.msra.mxu0 0.0
    %363 = vmatprep.subr.mxu0 0.0
    %364 = vmatpush1.msra.mxu0 0.0
    %365 = vmatprep.subr.mxu0 0.0
    %366 = vmatpush1.msra.mxu0 0.0
    %367 = vmatprep.subr.mxu0 0.0
    %368 = vmatpush1.msra.mxu0 0.0
    %369 = vmatprep.subr.mxu0 0.0
    %370 = vmatpush1.msra.mxu0 0.0
    %371 = vmatprep.subr.mxu0 0.0
    %372 = vmatpush1.msra.mxu0 0.0
    %373 = vmatprep.subr.mxu0 0.0
    %374 = vmatpush1.msra.mxu0 0.0
    %375 = vmatprep.subr.mxu0 0.0
    %376 = vmatpush1.msra.mxu0 0.0
    %377 = vmatprep.mubr.f32.mxu0 0.0
    %378 = vmatmul.mubr.f32.gmra.mrb[0].mxu0 %v311
    %v379 = vpop.f32.mrb[0].mxu0
    %v380 = vadd.f32 0.0, %v379
    %v381 = vpop.f32.mrb[0].mxu0
    %v382 = vadd.f32 0.0, %v381
    %383 = vdwg.mxu0
    %v384 = vlaneseq
    %v385 = vshrl.u32 %v384, 7
    %v386 = vsub.s32 2, %v385
    %v387 = vrot.slane %v32, %v386
    %v388 = vadd.f32 %v380, %v387
    %v389 = vmax.f32 %v388, 0.0
    %v390 = vlaneseq
    %v391 = vshrl.u32 %v390, 7
    %v392 = vsub.s32 3, %v391
    %v393 = vrot.slane %v32, %v392
    %v394 = vadd.f32 %v382, %v393
    %v395 = vtanh.pop %v394
    %v398 = vunpack.c.l.s4 1966171168
    %v399 = vunpack.c.0.s8 %v398
    %v400 = vlaneseq
    %v401 = vshrl.u32 %v400, 7
    %v402 = vsub.s32 %v399, %v401
    %v403 = vrot.slane %v389, %v402
    %v404 = vcombine.high %v403, %v403
    %v406 = vunpack.c.l.s4 1966171168
    %v407 = vunpack.c.0.s8 %v406
    %v408 = vlaneseq
    %v409 = vshrl.u32 %v408, 7
    %v410 = vsub.s32 %v407, %v409
    %v411 = vrot.slane %v403, %v410
    %v413 = vunpack.c.l.s4 1966171168
    %v414 = vunpack.c.0.s8 %v413
    %v415 = vlaneseq
    %v416 = vshrl.u32 %v415, 7
    %v417 = vsub.s32 %v414, %v416
    %v418 = vrot.slane %v404, %v417
    %v419 = vlaneseq
    %v420 = vshrl.u32 %v419, 7
    %v421 = vsub.s32 0, %v420
    %v422 = vrot.slane %v411, %v421
    %v423 = vlaneseq
    %v424 = vshrl.u32 %v423, 7
    %v425 = vsub.s32 0, %v424
    %v426 = vrot.slane %v418, %v425
    %v429 = vadd.f32 %v115, %v422
    %v430 = vadd.f32 %v121, %v426
    %v431 = vmax.f32 %v429, 0.0
    %v432 = vmax.f32 %v430, 0.0
    %v433 = vld [vmem:[%s5] sm:$0xff]
    %v434 = vld [vmem:[%s5 + $0x8] sm:$0xff]
    %v435 = vld [vmem:[%s5 + $0x10] sm:$0xff]
    %v436 = vld [vmem:[%s5 + $0x18] sm:$0xff]
    %v437 = vld [vmem:[%s5 + $0x20] sm:$0xff]
    %v438 = vld [vmem:[%s5 + $0x28] sm:$0xff]
    %v439 = vld [vmem:[%s5 + $0x30] sm:$0xff]
    %v440 = vld [vmem:[%s5 + $0x38] sm:$0xff]
    %v441 = vld [vmem:[%s5 + $0x40] sm:$0xff]
    %v442 = vld [vmem:[%s5 + $0x48] sm:$0xff]
    %v443 = vld [vmem:[%s5 + $0x50] sm:$0xff]
    %v444 = vld [vmem:[%s5 + $0x58] sm:$0xff]
    %v445 = vld [vmem:[%s5 + $0x60] sm:$0xff]
    %v446 = vld [vmem:[%s5 + $0x68] sm:$0xff]
    %v447 = vld [vmem:[%s5 + $0x70] sm:$0xff]
    %v448 = vld [vmem:[%s5 + $0x78] sm:$0xff]
    %v449 = vlaneseq
    %v450 = vshrl.u32 %v449, 7
    %v451 = vsub.s32 4, %v450
    %v452 = vrot.slane %v32, %v451
    %453 = vmatprep.subr.mxu0 0.0
    %454 = vmatpush1.msra.mxu0 %v433
    %455 = vmatprep.subr.mxu0 0.0
    %456 = vmatpush1.msra.mxu0 %v434
    %457 = vmatprep.subr.mxu0 0.0
    %458 = vmatpush1.msra.mxu0 %v435
    %459 = vmatprep.subr.mxu0 0.0
    %460 = vmatpush1.msra.mxu0 %v436
    %461 = vmatprep.subr.mxu0 0.0
    %462 = vmatpush1.msra.mxu0 %v437
    %463 = vmatprep.subr.mxu0 0.0
    %464 = vmatpush1.msra.mxu0 %v438
    %465 = vmatprep.subr.mxu0 0.0
    %466 = vmatpush1.msra.mxu0 %v439
    %467 = vmatprep.subr.mxu0 0.0
    %468 = vmatpush1.msra.mxu0 %v440
    %469 = vmatprep.subr.mxu0 0.0
    %470 = vmatpush1.msra.mxu0 %v441
    %471 = vmatprep.subr.mxu0 0.0
    %472 = vmatpush1.msra.mxu0 %v442
    %473 = vmatprep.subr.mxu0 0.0
    %474 = vmatpush1.msra.mxu0 %v443
    %475 = vmatprep.subr.mxu0 0.0
    %476 = vmatpush1.msra.mxu0 %v444
    %477 = vmatprep.subr.mxu0 0.0
    %478 = vmatpush1.msra.mxu0 %v445
    %479 = vmatprep.subr.mxu0 0.0
    %480 = vmatpush1.msra.mxu0 %v446
    %481 = vmatprep.subr.mxu0 0.0
    %482 = vmatpush1.msra.mxu0 %v447
    %483 = vmatprep.subr.mxu0 0.0
    %484 = vmatpush1.msra.mxu0 %v448
    %485 = vmatprep.subr.mxu0 0.0
    %486 = vmatpush1.msra.mxu0 0.0
    %487 = vmatprep.subr.mxu0 0.0
    %488 = vmatpush1.msra.mxu0 0.0
    %489 = vmatprep.subr.mxu0 0.0
    %490 = vmatpush1.msra.mxu0 0.0
    %491 = vmatprep.subr.mxu0 0.0
    %492 = vmatpush1.msra.mxu0 0.0
    %493 = vmatprep.subr.mxu0 0.0
    %494 = vmatpush1.msra.mxu0 0.0
    %495 = vmatprep.subr.mxu0 0.0
    %496 = vmatpush1.msra.mxu0 0.0
    %497 = vmatprep.subr.mxu0 0.0
    %498 = vmatpush1.msra.mxu0 0.0
    %499 = vmatprep.subr.mxu0 0.0
    %500 = vmatpush1.msra.mxu0 0.0
    %501 = vmatprep.subr.mxu0 0.0
    %502 = vmatpush1.msra.mxu0 0.0
    %503 = vmatprep.subr.mxu0 0.0
    %504 = vmatpush1.msra.mxu0 0.0
    %505 = vmatprep.subr.mxu0 0.0
    %506 = vmatpush1.msra.mxu0 0.0
    %507 = vmatprep.subr.mxu0 0.0
    %508 = vmatpush1.msra.mxu0 0.0
    %509 = vmatprep.subr.mxu0 0.0
    %510 = vmatpush1.msra.mxu0 0.0
    %511 = vmatprep.subr.mxu0 0.0
    %512 = vmatpush1.msra.mxu0 0.0
    %513 = vmatprep.subr.mxu0 0.0
    %514 = vmatpush1.msra.mxu0 0.0
    %515 = vmatprep.subr.mxu0 0.0
    %516 = vmatpush1.msra.mxu0 0.0
    %517 = vmatprep.mubr.f32.mxu0 0.0
    %518 = vmatmul.mubr.f32.gmra.mrb[0].mxu0 %v431
    %v519 = vpop.f32.mrb[0].mxu0
    %v520 = vadd.f32 %v452, %v519
    %v521 = vpop.f32.mrb[0].mxu0
    %522 = vmatprep.mubr.f32.mxu0 0.0
    %523 = vmatmul.mubr.f32.gmra.mrb[0].mxu0 %v432
    %v524 = vpop.f32.mrb[0].mxu0
    %v525 = vadd.f32 %v452, %v524
    %v526 = vpop.f32.mrb[0].mxu0
    %527 = vdwg.mxu0
    %528 = vrot.lane.b32.xlu0 %v30, 104
    %v529 = vpop.permute.xlu0 %528
    %530 = vrot.lane.b32.xlu0 %v31, 104
    %v531 = vpop.permute.xlu0 %530
    %v534 = vsub.f32 %v520, %v529
    %v535 = vsub.f32 %v525, %v531
    %v536 = vmul.f32 %v534, %v534
    %v537 = vmul.f32 %v535, %v535
    %vm538 = vcmask 64512
    %v539 = vsel %vm538, %v536, 0.0
    %v540 = vsel %vm538, %v537, 0.0
    %v541 = vadd.f32 %v539, %v540
    %542 = vadd.xlane.f32.xlu0 %v541
    %v543 = vpop.xlane.xlu0 %542
    %v544 = vrot.slane %v543, 4
    %v545 = vadd.f32 %v543, %v544
    %v546 = vrot.slane %v545, 2
    %v547 = vadd.f32 %v545, %v546
    %v548 = vrot.slane %v547, 1
    %v549 = vadd.f32 %v547, %v548
    %s550 = vtos %v549
    %v551 = vrcp.pop 128.0
    %s552 = vtos %v551
    %s553 = smul.f32 %s550, %s552
    %555 = vrot.lane.b32.xlu0 %v276, 64
    %v556 = vpop.permute.xlu0 %555
    %vm558 = vcmask 517120
    %v559 = vsel %vm558, %v556, 0.0
    %560 = vadd.xlane.f32.xlu0 %v559
    %v561 = vpop.xlane.xlu0 %560
    %v562 = vmul.f32 %v561, 0.5
    %v563 = vadd.f32 %v562, 90.812065
    %vm564 = vcmask 1024
    %v565 = vsel %vm564, %v563, 0.0
    %566 = vadd.xlane.f32.xlu0 %v565
    %v567 = vpop.xlane.xlu0 %566
    %v568 = vrot.slane %v567, 4
    %v569 = vadd.f32 %v567, %v568
    %v570 = vrot.slane %v569, 2
    %v571 = vadd.f32 %v569, %v570
    %v572 = vrot.slane %v571, 1
    %v573 = vadd.f32 %v571, %v572
    %s574 = vtos %v573
    %v575 = vrcp.pop 2.0
    %s576 = vtos %v575
    %s577 = smul.f32 %s574, %s576
    %s578 = ssub.f32 0.0, %s577
    %v579 = vld [vmem:[%s6] sm:$0xff]
    %v580 = vld [vmem:[%s6 + $0x8] sm:$0xff]
    %v581 = vld [vmem:[%s6 + $0x10] sm:$0xff]
    %v582 = vld [vmem:[%s6 + $0x18] sm:$0xff]
    %v583 = vld [vmem:[%s6 + $0x20] sm:$0xff]
    %v584 = vld [vmem:[%s6 + $0x28] sm:$0xff]
    %v585 = vld [vmem:[%s6 + $0x30] sm:$0xff]
    %v586 = vld [vmem:[%s6 + $0x38] sm:$0xff]
    %v587 = vld [vmem:[%s6 + $0x40] sm:$0xff]
    %v588 = vld [vmem:[%s6 + $0x48] sm:$0xff]
    %v589 = vld [vmem:[%s6 + $0x50] sm:$0xff]
    %v590 = vld [vmem:[%s6 + $0x58] sm:$0xff]
    %v591 = vld [vmem:[%s6 + $0x60] sm:$0xff]
    %v592 = vld [vmem:[%s6 + $0x68] sm:$0xff]
    %v593 = vld [vmem:[%s6 + $0x70] sm:$0xff]
    %v594 = vld [vmem:[%s6 + $0x78] sm:$0xff]
    %v595 = vlaneseq
    %v596 = vshrl.u32 %v595, 7
    %v597 = vsub.s32 5, %v596
    %v598 = vrot.slane %v32, %v597
    %599 = vmatprep.subr.mxu0 0.0
    %600 = vmatpush1.msra.mxu0 %v579
    %601 = vmatprep.subr.mxu0 0.0
    %602 = vmatpush1.msra.mxu0 %v580
    %603 = vmatprep.subr.mxu0 0.0
    %604 = vmatpush1.msra.mxu0 %v581
    %605 = vmatprep.subr.mxu0 0.0
    %606 = vmatpush1.msra.mxu0 %v582
    %607 = vmatprep.subr.mxu0 0.0
    %608 = vmatpush1.msra.mxu0 %v583
    %609 = vmatprep.subr.mxu0 0.0
    %610 = vmatpush1.msra.mxu0 %v584
    %611 = vmatprep.subr.mxu0 0.0
    %612 = vmatpush1.msra.mxu0 %v585
    %613 = vmatprep.subr.mxu0 0.0
    %614 = vmatpush1.msra.mxu0 %v586
    %615 = vmatprep.subr.mxu0 0.0
    %616 = vmatpush1.msra.mxu0 %v587
    %617 = vmatprep.subr.mxu0 0.0
    %618 = vmatpush1.msra.mxu0 %v588
    %619 = vmatprep.subr.mxu0 0.0
    %620 = vmatpush1.msra.mxu0 %v589
    %621 = vmatprep.subr.mxu0 0.0
    %622 = vmatpush1.msra.mxu0 %v590
    %623 = vmatprep.subr.mxu0 0.0
    %624 = vmatpush1.msra.mxu0 %v591
    %625 = vmatprep.subr.mxu0 0.0
    %626 = vmatpush1.msra.mxu0 %v592
    %627 = vmatprep.subr.mxu0 0.0
    %628 = vmatpush1.msra.mxu0 %v593
    %629 = vmatprep.subr.mxu0 0.0
    %630 = vmatpush1.msra.mxu0 %v594
    %631 = vmatprep.subr.mxu0 0.0
    %632 = vmatpush1.msra.mxu0 0.0
    %633 = vmatprep.subr.mxu0 0.0
    %634 = vmatpush1.msra.mxu0 0.0
    %635 = vmatprep.subr.mxu0 0.0
    %636 = vmatpush1.msra.mxu0 0.0
    %637 = vmatprep.subr.mxu0 0.0
    %638 = vmatpush1.msra.mxu0 0.0
    %639 = vmatprep.subr.mxu0 0.0
    %640 = vmatpush1.msra.mxu0 0.0
    %641 = vmatprep.subr.mxu0 0.0
    %642 = vmatpush1.msra.mxu0 0.0
    %643 = vmatprep.subr.mxu0 0.0
    %644 = vmatpush1.msra.mxu0 0.0
    %645 = vmatprep.subr.mxu0 0.0
    %646 = vmatpush1.msra.mxu0 0.0
    %647 = vmatprep.subr.mxu0 0.0
    %648 = vmatpush1.msra.mxu0 0.0
    %649 = vmatprep.subr.mxu0 0.0
    %650 = vmatpush1.msra.mxu0 0.0
    %651 = vmatprep.subr.mxu0 0.0
    %652 = vmatpush1.msra.mxu0 0.0
    %653 = vmatprep.subr.mxu0 0.0
    %654 = vmatpush1.msra.mxu0 0.0
    %655 = vmatprep.subr.mxu0 0.0
    %656 = vmatpush1.msra.mxu0 0.0
    %657 = vmatprep.subr.mxu0 0.0
    %658 = vmatpush1.msra.mxu0 0.0
    %659 = vmatprep.subr.mxu0 0.0
    %660 = vmatpush1.msra.mxu0 0.0
    %661 = vmatprep.subr.mxu0 0.0
    %662 = vmatpush1.msra.mxu0 0.0
    %663 = vmatprep.mubr.f32.mxu0 0.0
    %664 = vmatmul.mubr.f32.gmra.mrb[0].mxu0 %v395
    %v665 = vpop.f32.mrb[0].mxu0
    %v666 = vadd.f32 %v598, %v665
    %v667 = vpop.f32.mrb[0].mxu0
    %668 = vdwg.mxu0
    %v669 = vadd.f32 %v292, %v666
    %v670 = vmul.f32 %v395, %v395
    %v671 = vsub.f32 1.0, %v670
    %v672 = vlaneseq
    %v673 = vshrl.u32 %v672, 7
    %v674 = vsub.s32 6, %v673
    %v675 = vrot.slane %v32, %v674
    %v676 = vmul.f32 %v671, %v675
    %vm677 = vcmask 1041408
    %v678 = vsel %vm677, %v676, 0.0
    %679 = vadd.xlane.f32.xlu0 %v678
    %v680 = vpop.xlane.xlu0 %679
    %v681 = vmul.f32 %v680, -1.0
    %v682 = vmul.f32 %v669, %v669
    %v683 = vsel %vm558, %v682, 0.0
    %684 = vadd.xlane.f32.xlu0 %v683
    %v685 = vpop.xlane.xlu0 %684
    %v686 = vmul.f32 %v685, 0.5
    %v687 = vsub.f32 -58.812065, %v686
    %v688 = vsub.f32 %v687, %v681
    %v689 = vsel %vm564, %v688, 0.0
    %690 = vadd.xlane.f32.xlu0 %v689
    %v691 = vpop.xlane.xlu0 %690
    %v692 = vrot.slane %v691, 4
    %v693 = vadd.f32 %v691, %v692
    %v694 = vrot.slane %v693, 2
    %v695 = vadd.f32 %v693, %v694
    %v696 = vrot.slane %v695, 1
    %v697 = vadd.f32 %v695, %v696
    %s698 = vtos %v697
    %v699 = vrcp.pop 2.0
    %s700 = vtos %v699
    %s701 = smul.f32 %s698, %s700
    %s702 = ssub.f32 0.0, %s701
    %s703 = scalar_lea.smem [#allocation2], 0
    %704 = sst [smem:[%s703]] %s553
    %s705 = scalar_lea.smem [#allocation2], 1
    %706 = sst [smem:[%s705]] %s578
    %s707 = scalar_lea.smem [#allocation2], 2
    %708 = sst [smem:[%s707]] %s702
    %s709 = scalar_lea.smem [#allocation2], 3
    %710 = sst [smem:[%s709]] 0.0
    // Predicated region
    $region34: #{cvaef_forward.1} parent=1 // pred_check
      _
    $region35: #{cvaef_forward.1} parent=1 // pred_check_branch
      %712 = sbr.rel (0) target = $region37
    $region36: #{cvaef_forward.1} parent=1 // pred_region
      %s714 = ssub.s32 16, 16
      %715 = vsyncadd [#allocation3], %s714
      %s717 = sshll.u32 %s8, 4
      %s718 = int_to_ptr.vmem [resolvable:$true] %s717
      %720 = dma.smem_to_vmem [#allocation2], 16, %s718, [#allocation3]
    $region37: #{cvaef_forward.1} parent=1 // pred_fallthru
      _
    // Predicated region
    $region38: #{cvaef_forward.1} parent=1 // pred_check
      _
    $region39: #{cvaef_forward.1} parent=1 // pred_check_branch
      %722 = sbr.rel (0) target = $region41
    $region40: #{cvaef_forward.1} parent=1 // pred_region
      %723 = dma.done [#allocation3], 16
    $region41: #{cvaef_forward.1} parent=1 // pred_fallthru
      _
    %724 = sfence
    %725 = vsyncpa [#allocation3], 1

</llo_original>
